<compile_context>
chip_gen: v7x
topology: tpu7x:2x2x1
jax: 0.10.0
libtpu: 0.0.40
codegen_flags: <defaults>
</compile_context>

<pallas_src>
import math
import functools

import jax
import jax.numpy as jnp
from jax.experimental import pallas as pl
from jax.experimental.pallas import tpu as pltpu


def _arcface_kernel(label_ref, emb_ref, w_ref, invn_ref, out_ref, *,
                    tile_c, s, cos_m, sin_m, mm, threshold):
    j = pl.program_id(1)          # class-column tile index

    # Raw (possibly bf16) weight tile goes straight from DMA to the MXU; the
    # column L2 normalization is a precomputed (1, tile_c) post-matmul scale.
    cos_theta = jnp.dot(emb_ref[...], w_ref[...],
                        preferred_element_type=jnp.float32)   # (tile_b, tile_c)
    cos_theta = jnp.clip(cos_theta * invn_ref[...], -1.0, 1.0)

    # Arcface margin chain in f32.  Runs unconditionally: while the kernel is
    # HBM-bound on the E x C weight stream this VPU work is free filler.
    sin_theta = jnp.sqrt(jnp.maximum(1.0 - cos_theta * cos_theta, 0.0))
    cos_theta_m = cos_theta * cos_m - sin_theta * sin_m
    cos_theta_m = jnp.where(cos_theta - threshold <= 0.0,
                            cos_theta - mm, cos_theta_m)

    # Apply the margin only at each row's ground-truth column: compare the
    # local column iota against (label - j*tile_c), a (tile_b, 1) subtract.
    local_label = label_ref[...] - j * tile_c                 # (tile_b, 1)
    cols = jax.lax.broadcasted_iota(jnp.int32, cos_theta.shape, 1)
    is_target = cols == local_label
    out_ref[...] = (jnp.where(is_target, cos_theta_m, cos_theta) * s
                    ).astype(out_ref.dtype)


def _vmem_cap_bytes():
    """~75% of physical VMEM (generation-aware); 48 MiB fallback (v7x-safe)."""
    physical = 64 << 20
    try:
        info = pltpu.get_tpu_info()
        for attr in ("vmem_capacity_bytes", "vmem_size_bytes", "vmem_bytes"):
            v = getattr(info, attr, None)
            if v:
                physical = int(v)
                break
    except Exception:
        pass
    return (physical * 3) // 4


def arcface_forward(embeddings, label, kernel, *, s=64.0, m=0.5,
                    tile_b=None, tile_c=1024, matmul_dtype=None,
                    out_dtype=jnp.float32, weight_buffers=2):
    """embeddings: (B, E), label: (B,) int, kernel: (E, C) -> logits (B, C).

    tile_c must be a multiple of 128 (keep it a multiple of 256 on v6e/v7x).
    On v5e/v7x, matmul_dtype=jnp.bfloat16 (and optionally bf16 out_dtype) is
    recommended: it halves the dominant weight / logit HBM streams while all
    margin math stays in f32.
    """
    B, E = embeddings.shape
    E2, C = kernel.shape
    assert E == E2

    cos_m = math.cos(m)
    sin_m = math.sin(m)
    mm = sin_m * m
    threshold = math.cos(math.pi - m)

    # Column L2 normalization folded into a precomputed post-matmul scale;
    # computed once in f32 from the original weights (exact on the bf16 path).
    # Note: rsqrt(max(., 1e-30)) bounds true zero-norm columns where the
    # reference would produce Inf/NaN (documented divergence).
    k32 = kernel.astype(jnp.float32)
    inv_norm = jax.lax.rsqrt(jnp.maximum(jnp.sum(k32 * k32, axis=0), 1e-30))
    inv_norm = inv_norm.reshape(1, C).astype(jnp.float32)

    # Optional low-precision matmul inputs (halves the HBM weight stream and
    # uses the native bf16 MXU path); margin math stays in f32.
    if matmul_dtype is not None:
        embeddings = embeddings.astype(matmul_dtype)
        kernel = kernel.astype(matmul_dtype)

    e_isz = jnp.dtype(embeddings.dtype).itemsize
    w_isz = jnp.dtype(kernel.dtype).itemsize
    o_isz = jnp.dtype(out_dtype).itemsize

    # Keep the whole (padded) batch resident when it fits comfortably, so the
    # dominant E x C weight stream is read from HBM exactly once and the only
    # megacore-parallel grid axis is the class axis.
    if tile_b is None:
        b8 = ((B + 7) // 8) * 8
        tile_b = b8 if b8 * E * e_isz <= (16 << 20) else 256
    num_bt = pl.cdiv(B, tile_b)
    num_ct = pl.cdiv(C, tile_c)
    B_pad = num_bt * tile_b
    C_pad = num_ct * tile_c

    label = label.astype(jnp.int32)
    if C_pad != C:
        kernel = jnp.pad(kernel, ((0, 0), (0, C_pad - C)))
        inv_norm = jnp.pad(inv_norm, ((0, 0), (0, C_pad - C)))
    if B_pad != B:
        embeddings = jnp.pad(embeddings, ((0, B_pad - B), (0, 0)))
        label = jnp.pad(label, (0, B_pad - B), constant_values=-1)
    label2d = label.reshape(B_pad, 1)

    kernel_fn = functools.partial(
        _arcface_kernel, tile_c=tile_c, s=s,
        cos_m=cos_m, sin_m=sin_m, mm=mm, threshold=threshold)

    # VMEM budget: buffered weight / embeddings / output tiles, the small
    # label / inv_norm blocks, plus ~3 f32 (tile_b, tile_c) in-kernel
    # temporaries; capped generation-aware (<= ~48 MiB v7x, ~96 MiB v5e/v6e).
    n_wbuf = max(2, weight_buffers)
    vmem_bytes = (n_wbuf * E * tile_c * w_isz
                  + 2 * tile_b * E * e_isz
                  + 2 * tile_b * tile_c * o_isz
                  + 2 * tile_c * 4 + 2 * tile_b * 4
                  + 3 * tile_b * tile_c * 4)
    vmem_limit = int(min(max(vmem_bytes + (4 << 20), 8 << 20), _vmem_cap_bytes()))

    w_spec_kwargs = {}
    if weight_buffers != 2:
        w_spec_kwargs["pipeline_mode"] = pl.Buffered(weight_buffers)

    grid_spec = pltpu.PrefetchScalarGridSpec(
        num_scalar_prefetch=0,
        grid=(num_bt, num_ct),                      # class tiles iterate fastest
        in_specs=[
            pl.BlockSpec((tile_b, 1), lambda i, j: (i, 0)),      # labels
            pl.BlockSpec((tile_b, E), lambda i, j: (i, 0)),      # embeddings
            pl.BlockSpec((E, tile_c), lambda i, j: (0, j),
                         **w_spec_kwargs),                       # weights
            pl.BlockSpec((1, tile_c), lambda i, j: (0, j)),      # inv_norm
        ],
        out_specs=pl.BlockSpec((tile_b, tile_c), lambda i, j: (i, j)),
    )

    cost = pl.CostEstimate(
        flops=2 * B_pad * C_pad * E,
        transcendentals=0,
        bytes_accessed=(num_bt * E * C_pad * w_isz
                        + B_pad * E * e_isz
                        + B_pad * C_pad * o_isz
                        + C_pad * 4 + B_pad * 4))

    out = pl.pallas_call(
        kernel_fn,
        out_shape=jax.ShapeDtypeStruct((B_pad, C_pad), out_dtype),
        grid_spec=grid_spec,
        compiler_params=pltpu.CompilerParams(
            # Class axis is the one sharded across TensorCores (batch axis is
            # usually a single step), so the weight streams once in aggregate.
            dimension_semantics=("arbitrary", "parallel"),
            vmem_limit_bytes=vmem_limit),
        cost_estimate=cost,
    )(label2d, embeddings, kernel, inv_norm)

    return out[:B, :C]


def arcface_reference(embeddings, label, kernel, *, s=64.0, m=0.5):
    cos_m, sin_m = math.cos(m), math.sin(m)
    mm = sin_m * m
    threshold = math.cos(math.pi - m)
    kn = kernel / jnp.linalg.norm(kernel, axis=0, keepdims=True)
    cos_theta = jnp.clip(embeddings @ kn, -1.0, 1.0)
    sin_theta = jnp.sqrt(1.0 - cos_theta ** 2)
    cos_theta_m = cos_theta * cos_m - sin_theta * sin_m
    cos_theta_m = jnp.where(cos_theta - threshold <= 0, cos_theta - mm, cos_theta_m)
    onehot = jax.nn.one_hot(label, kernel.shape[1], dtype=bool)
    return jnp.where(onehot, cos_theta_m, cos_theta) * s


if __name__ == "__main__":
    # Small stand-ins for (embedding_size=512, classnum=51332): E=64, C=300.
    # C=300 deliberately not a multiple of 128 to exercise the cdiv+pad path.
    B, E, C = 16, 64, 300
    key = jax.random.PRNGKey(0)
    k_emb, k_w, k_lbl = jax.random.split(key, 3)

    embeddings = jax.random.normal(k_emb, (B, E), dtype=jnp.float32)
    # Deterministic init mimicking uniform_(-1,1).renorm_(2,1,.).mul_(.)
    # (columns with bounded norm); exact scale is irrelevant since the forward
    # re-normalizes columns.
    w = jax.random.uniform(k_w, (E, C), dtype=jnp.float32, minval=-1.0, maxval=1.0)
    w = w / jnp.maximum(jnp.linalg.norm(w, axis=0, keepdims=True), 1.0)
    label = jax.random.randint(k_lbl, (B,), 0, C, dtype=jnp.int32)

    ref = arcface_reference(embeddings, label, w)

    # 1) Default config: whole batch resident, single class tile (C pad -> 1024).
    out = arcface_forward(embeddings, label, w)
    out = jax.block_until_ready(out)
    assert out.shape == (B, C)
    assert jnp.allclose(out, ref, atol=2e-3, rtol=2e-3), "f32 default mismatch"

    # 2) Tiled path: 2 batch tiles x 3 class tiles (C padded 300 -> 384).
    out_t = arcface_forward(embeddings, label, w, tile_b=8, tile_c=128)
    out_t = jax.block_until_ready(out_t)
    assert out_t.shape == (B, C)
    assert jnp.allclose(out_t, ref, atol=2e-3, rtol=2e-3), "f32 tiled mismatch"

    # 3) bf16 weight/embedding streaming path (inv_norm stays exact f32);
    #    looser tolerance accounts for bf16 matmul rounding at scale s=64.
    out_bf16 = arcface_forward(embeddings, label, w, tile_c=128,
                               matmul_dtype=jnp.bfloat16)
    out_bf16 = jax.block_until_ready(out_bf16)
    assert out_bf16.shape == (B, C)
    assert jnp.all(jnp.isfinite(out_bf16))
    assert jnp.allclose(out_bf16, ref, atol=0.5, rtol=0.15), "bf16 mismatch"

    # 4) bf16 logits writeback (halves the B x C output HBM stream).
    out_lo = arcface_forward(embeddings, label, w, out_dtype=jnp.bfloat16)
    out_lo = jax.block_until_ready(out_lo)
    assert out_lo.shape == (B, C)
    assert jnp.allclose(out_lo.astype(jnp.float32), ref, atol=0.5, rtol=0.05), \
        "bf16-out mismatch"

    # TODO(synk): like the PyTorch module, embeddings are NOT L2-normalized
    # here; cos_theta is only a true cosine if the caller normalizes features.
    print("KERNEL_OK")
</pallas_src>

<mosaic_0001>
module attributes {stable_mosaic.version = 11 : i64} {
  func.func @_arcface_kernel(%arg0: i32, %arg1: i32, %arg2: memref<16x1xi32, #tpu.memory_space<vmem>>, %arg3: memref<16x64xf32, #tpu.memory_space<vmem>>, %arg4: memref<64x1024xf32, #tpu.memory_space<vmem>>, %arg5: memref<1x1024xf32, #tpu.memory_space<vmem>>, %arg6: memref<16x1024xf32, #tpu.memory_space<vmem>>) attributes {dimension_semantics = [#tpu.dimension_semantics<arbitrary>, #tpu.dimension_semantics<parallel>], iteration_bounds = array<i64: 1, 1>, scalar_prefetch = 0 : i64, scratch_operands = 0 : i64, tpu.core_type = #tpu.core_type<tc>, window_params = [{transform_indices = @transform_0, window_bounds = array<i64: 16, 1>}, {transform_indices = @transform_1, window_bounds = array<i64: 16, 64>}, {transform_indices = @transform_2, window_bounds = array<i64: 64, 1024>}, {transform_indices = @transform_3, window_bounds = array<i64: 1, 1024>}, {transform_indices = @transform_4, window_bounds = array<i64: 16, 1024>}]} {
    %c0 = arith.constant 0 : index
    %c0_0 = arith.constant 0 : index
    %0 = vector.load %arg3[%c0, %c0_0] : memref<16x64xf32, #tpu.memory_space<vmem>>, vector<16x64xf32>
    %c0_1 = arith.constant 0 : index
    %c0_2 = arith.constant 0 : index
    %1 = vector.load %arg4[%c0_1, %c0_2] : memref<64x1024xf32, #tpu.memory_space<vmem>>, vector<64x1024xf32>
    %cst = arith.constant dense<0.000000e+00> : vector<16x1024xf32>
    %2 = tpu.matmul %0, %1, %cst {dimension_numbers = #tpu.dot_dimension_numbers<[1], [0], [0], [1], [0, 0, 1, 1], [], []>} : vector<16x64xf32>, vector<64x1024xf32>, vector<16x1024xf32> -> vector<16x1024xf32>
    %c0_3 = arith.constant 0 : index
    %c0_4 = arith.constant 0 : index
    %3 = vector.load %arg5[%c0_3, %c0_4] : memref<1x1024xf32, #tpu.memory_space<vmem>>, vector<1x1024xf32>
    %4 = vector.broadcast %3 : vector<1x1024xf32> to vector<16x1024xf32>
    %5 = arith.mulf %2, %4 : vector<16x1024xf32>
    %cst_5 = arith.constant -1.000000e+00 : f32
    %cst_6 = arith.constant 1.000000e+00 : f32
    %6 = vector.broadcast %cst_5 : f32 to vector<16x1024xf32>
    %7 = arith.maximumf %6, %5 : vector<16x1024xf32>
    %8 = vector.broadcast %cst_6 : f32 to vector<16x1024xf32>
    %9 = arith.minimumf %8, %7 : vector<16x1024xf32>
    %10 = arith.mulf %9, %9 : vector<16x1024xf32>
    %cst_7 = arith.constant 1.000000e+00 : f32
    %11 = vector.broadcast %cst_7 : f32 to vector<16x1024xf32>
    %12 = arith.subf %11, %10 : vector<16x1024xf32>
    %cst_8 = arith.constant 0.000000e+00 : f32
    %13 = vector.broadcast %cst_8 : f32 to vector<16x1024xf32>
    %14 = arith.maximumf %12, %13 : vector<16x1024xf32>
    %15 = math.sqrt %14 : vector<16x1024xf32>
    %cst_9 = arith.constant 0.87758255 : f32
    %16 = vector.broadcast %cst_9 : f32 to vector<16x1024xf32>
    %17 = arith.mulf %9, %16 : vector<16x1024xf32>
    %cst_10 = arith.constant 0.47942555 : f32
    %18 = vector.broadcast %cst_10 : f32 to vector<16x1024xf32>
    %19 = arith.mulf %15, %18 : vector<16x1024xf32>
    %20 = arith.subf %17, %19 : vector<16x1024xf32>
    %cst_11 = arith.constant -0.87758255 : f32
    %21 = vector.broadcast %cst_11 : f32 to vector<16x1024xf32>
    %22 = arith.subf %9, %21 : vector<16x1024xf32>
    %cst_12 = arith.constant 0.000000e+00 : f32
    %23 = vector.broadcast %cst_12 : f32 to vector<16x1024xf32>
    %24 = arith.cmpf ole, %22, %23 : vector<16x1024xf32>
    %cst_13 = arith.constant 0.239712775 : f32
    %25 = vector.broadcast %cst_13 : f32 to vector<16x1024xf32>
    %26 = arith.subf %9, %25 : vector<16x1024xf32>
    %27 = arith.select %24, %26, %20 : vector<16x1024xi1>, vector<16x1024xf32>
    %c0_14 = arith.constant 0 : index
    %c0_15 = arith.constant 0 : index
    %28 = vector.load %arg2[%c0_14, %c0_15] : memref<16x1xi32, #tpu.memory_space<vmem>>, vector<16x1xi32>
    %c1024_i32 = arith.constant 1024 : i32
    %29 = arith.muli %arg1, %c1024_i32 : i32
    %30 = vector.broadcast %29 : i32 to vector<16x1xi32>
    %31 = arith.subi %28, %30 : vector<16x1xi32>
    %32 = tpu.iota {dimensions = array<i32: 1>} : vector<16x1024xi32>
    %33 = vector.broadcast %31 : vector<16x1xi32> to vector<16x1024xi32>
    %34 = arith.cmpi eq, %32, %33 : vector<16x1024xi32>
    %35 = arith.select %34, %27, %9 : vector<16x1024xi1>, vector<16x1024xf32>
    %cst_16 = arith.constant 6.400000e+01 : f32
    %36 = vector.broadcast %cst_16 : f32 to vector<16x1024xf32>
    %37 = arith.mulf %35, %36 : vector<16x1024xf32>
    %c0_17 = arith.constant 0 : index
    %c0_18 = arith.constant 0 : index
    %38 = vector.load %arg6[%c0_17, %c0_18] : memref<16x1024xf32, #tpu.memory_space<vmem>>, vector<16x1024xf32>
    tpu.vector_store %arg6[%c0_17, %c0_18], %37 {strides = array<i32>} : memref<16x1024xf32, #tpu.memory_space<vmem>>, vector<16x1024xf32>,
    return
  }
  func.func @transform_0(%arg0: i32, %arg1: i32) -> (i32, i32) {
    %c0_i32 = arith.constant 0 : i32
    %c0_i32_0 = arith.constant 0 : i32
    return %arg0, %c0_i32 : i32, i32
  }
  func.func @transform_1(%arg0: i32, %arg1: i32) -> (i32, i32) {
    %c0_i32 = arith.constant 0 : i32
    %c0_i32_0 = arith.constant 0 : i32
    return %arg0, %c0_i32 : i32, i32
  }
  func.func @transform_2(%arg0: i32, %arg1: i32) -> (i32, i32) {
    %c0_i32 = arith.constant 0 : i32
    %c0_i32_0 = arith.constant 0 : i32
    return %c0_i32, %arg1 : i32, i32
  }
  func.func @transform_3(%arg0: i32, %arg1: i32) -> (i32, i32) {
    %c0_i32 = arith.constant 0 : i32
    %c0_i32_0 = arith.constant 0 : i32
    return %c0_i32, %arg1 : i32, i32
  }
  func.func @transform_4(%arg0: i32, %arg1: i32) -> (i32, i32) {
    %c0_i32 = arith.constant 0 : i32
    return %arg0, %arg1 : i32, i32
  }
}

</mosaic_0001>

<llo_original>
// kernel: tpu_custom_call.1
$region0: #{tpu_custom_call.1}
  #allocation0 [shape = 'u32[]', space=smem, size = 0x4, offset = 0x4, fixed_abs, tag = 'smem constant byte address 0x4 - core index']
  #allocation1 [shape = 'u32[144,128]{1,0:T(1,128)}', space=vmem, size = 0x12000, scoped, tag = 'internal scratch']
  %s0 = inlined_call_operand.vmem [shape: s32[16,1], index: 0, kind: input, shape index: {}]
  %s1 = inlined_call_operand.vmem [shape: f32[16,64], index: 1, kind: input, shape index: {}]
  %s2 = inlined_call_operand.hbm [shape: f32[64,1024], index: 2, kind: input, shape index: {}]
  %s3 = inlined_call_operand.vmem [shape: f32[1,1024], index: 3, kind: input, shape index: {}]
  %s4 = inlined_call_operand.hbm [shape: f32[16,1024], index: 4, kind: output, shape index: {}]
  %s5 = sld [smem:[#allocation0]]
  $region30: #{tpu_custom_call.1} parent=0
    _
  %s7 = ssub.s32 1, %s5
  %s8 = scalar_select 0, %s7, %s5
  $region1: #{tpu_custom_call.1} parent=0
    #allocation2 [shape = 'u8[262144]{0}', space=vmem, size = 0x40000, scoped, tag = 'input window, operand 2, single buffered']
    #allocation3 [shape = 's32[1]{0}', space=sflag, size = 0x4, scoped, tag = 'scoped memory for tpu_custom_call.1']
    #allocation4 [shape = 's32[1]{0}', space=sflag, size = 0x4, scoped, tag = 'scoped memory for tpu_custom_call.1']
    #allocation5 [shape = 'u8[65536]{0}', space=vmem, size = 0x10000, scoped, tag = 'output window, operand 0, single buffered']
    %9 = vsyncpa [#allocation3], 0
    %10 = vsyncpa [#allocation4], 0
    // Predicated region
    $region2: #{tpu_custom_call.1} parent=1 // pred_check
      _
    $region3: #{tpu_custom_call.1} parent=1 // pred_check_branch
      %12 = sbr.rel (0) target = $region5
    $region4: #{tpu_custom_call.1} parent=1 // pred_region
      _
    $region5: #{tpu_custom_call.1} parent=1 // pred_fallthru
      _
    // Predicated region
    $region6: #{tpu_custom_call.1} parent=1 // pred_check
      _
    $region7: #{tpu_custom_call.1} parent=1 // pred_check_branch
      %14 = sbr.rel (0) target = $region9
    $region8: #{tpu_custom_call.1} parent=1 // pred_region
      _
    $region9: #{tpu_custom_call.1} parent=1 // pred_fallthru
      _
    // Predicated region
    $region10: #{tpu_custom_call.1} parent=1 // pred_check
      _
    $region11: #{tpu_custom_call.1} parent=1 // pred_check_branch
      %16 = sbr.rel (0) target = $region13
    $region12: #{tpu_custom_call.1} parent=1 // pred_region
      %s18 = ssub.s32 8192, 8192
      %19 = vsyncadd [#allocation3], %s18
      %s20 = sshll.u32 [#allocation2], 4
      %s21 = int_to_ptr.vmem [resolvable:$true] %s20
      %26 = dma.hbm_to_vmem [thread:$0]  %s2, 8192, %s21, [#allocation3], 1024, 1024, 64
    $region13: #{tpu_custom_call.1} parent=1 // pred_fallthru
      _
    // Predicated region
    $region14: #{tpu_custom_call.1} parent=1 // pred_check
      _
    $region15: #{tpu_custom_call.1} parent=1 // pred_check_branch
      %28 = sbr.rel (0) target = $region17
    $region16: #{tpu_custom_call.1} parent=1 // pred_region
      _
    $region17: #{tpu_custom_call.1} parent=1 // pred_fallthru
      _
    // Predicated region
    $region18: #{tpu_custom_call.1} parent=1 // pred_check
      _
    $region19: #{tpu_custom_call.1} parent=1 // pred_check_branch
      %30 = sbr.rel (0) target = $region21
    $region20: #{tpu_custom_call.1} parent=1 // pred_region
      %31 = dma.done [#allocation3], 8192
    $region21: #{tpu_custom_call.1} parent=1 // pred_fallthru
      _
    %v32 = vld [vmem:[%s1] sm:$0xff]
    %v33 = vld [vmem:[%s1 + $0x8] sm:$0xff]
    %v34 = vld [vmem:[#allocation2] sm:$0xff]
    %v35 = vld [vmem:[#allocation2 + $0x8] sm:$0xff]
    %v36 = vld [vmem:[#allocation2 + $0x10] sm:$0xff]
    %v37 = vld [vmem:[#allocation2 + $0x18] sm:$0xff]
    %v38 = vld [vmem:[#allocation2 + $0x20] sm:$0xff]
    %v39 = vld [vmem:[#allocation2 + $0x28] sm:$0xff]
    %v40 = vld [vmem:[#allocation2 + $0x30] sm:$0xff]
    %v41 = vld [vmem:[#allocation2 + $0x38] sm:$0xff]
    %v42 = vld [vmem:[#allocation2 + $0x40] sm:$0xff]
    %v43 = vld [vmem:[#allocation2 + $0x48] sm:$0xff]
    %v44 = vld [vmem:[#allocation2 + $0x50] sm:$0xff]
    %v45 = vld [vmem:[#allocation2 + $0x58] sm:$0xff]
    %v46 = vld [vmem:[#allocation2 + $0x60] sm:$0xff]
    %v47 = vld [vmem:[#allocation2 + $0x68] sm:$0xff]
    %v48 = vld [vmem:[#allocation2 + $0x70] sm:$0xff]
    %v49 = vld [vmem:[#allocation2 + $0x78] sm:$0xff]
    %v50 = vld [vmem:[#allocation2 + $0x80] sm:$0xff]
    %v51 = vld [vmem:[#allocation2 + $0x88] sm:$0xff]
    %v52 = vld [vmem:[#allocation2 + $0x90] sm:$0xff]
    %v53 = vld [vmem:[#allocation2 + $0x98] sm:$0xff]
    %v54 = vld [vmem:[#allocation2 + $0xa0] sm:$0xff]
    %v55 = vld [vmem:[#allocation2 + $0xa8] sm:$0xff]
    %v56 = vld [vmem:[#allocation2 + $0xb0] sm:$0xff]
    %v57 = vld [vmem:[#allocation2 + $0xb8] sm:$0xff]
    %v58 = vld [vmem:[#allocation2 + $0xc0] sm:$0xff]
    %v59 = vld [vmem:[#allocation2 + $0xc8] sm:$0xff]
    %v60 = vld [vmem:[#allocation2 + $0xd0] sm:$0xff]
    %v61 = vld [vmem:[#allocation2 + $0xd8] sm:$0xff]
    %v62 = vld [vmem:[#allocation2 + $0xe0] sm:$0xff]
    %v63 = vld [vmem:[#allocation2 + $0xe8] sm:$0xff]
    %v64 = vld [vmem:[#allocation2 + $0xf0] sm:$0xff]
    %v65 = vld [vmem:[#allocation2 + $0xf8] sm:$0xff]
    %v66 = vld [vmem:[#allocation2 + $0x100] sm:$0xff]
    %v67 = vld [vmem:[#allocation2 + $0x108] sm:$0xff]
    %v68 = vld [vmem:[#allocation2 + $0x110] sm:$0xff]
    %v69 = vld [vmem:[#allocation2 + $0x118] sm:$0xff]
    %v70 = vld [vmem:[#allocation2 + $0x120] sm:$0xff]
    %v71 = vld [vmem:[#allocation2 + $0x128] sm:$0xff]
    %v72 = vld [vmem:[#allocation2 + $0x130] sm:$0xff]
    %v73 = vld [vmem:[#allocation2 + $0x138] sm:$0xff]
    %v74 = vld [vmem:[#allocation2 + $0x140] sm:$0xff]
    %v75 = vld [vmem:[#allocation2 + $0x148] sm:$0xff]
    %v76 = vld [vmem:[#allocation2 + $0x150] sm:$0xff]
    %v77 = vld [vmem:[#allocation2 + $0x158] sm:$0xff]
    %v78 = vld [vmem:[#allocation2 + $0x160] sm:$0xff]
    %v79 = vld [vmem:[#allocation2 + $0x168] sm:$0xff]
    %v80 = vld [vmem:[#allocation2 + $0x170] sm:$0xff]
    %v81 = vld [vmem:[#allocation2 + $0x178] sm:$0xff]
    %v82 = vld [vmem:[#allocation2 + $0x180] sm:$0xff]
    %v83 = vld [vmem:[#allocation2 + $0x188] sm:$0xff]
    %v84 = vld [vmem:[#allocation2 + $0x190] sm:$0xff]
    %v85 = vld [vmem:[#allocation2 + $0x198] sm:$0xff]
    %v86 = vld [vmem:[#allocation2 + $0x1a0] sm:$0xff]
    %v87 = vld [vmem:[#allocation2 + $0x1a8] sm:$0xff]
    %v88 = vld [vmem:[#allocation2 + $0x1b0] sm:$0xff]
    %v89 = vld [vmem:[#allocation2 + $0x1b8] sm:$0xff]
    %v90 = vld [vmem:[#allocation2 + $0x1c0] sm:$0xff]
    %v91 = vld [vmem:[#allocation2 + $0x1c8] sm:$0xff]
    %v92 = vld [vmem:[#allocation2 + $0x1d0] sm:$0xff]
    %v93 = vld [vmem:[#allocation2 + $0x1d8] sm:$0xff]
    %v94 = vld [vmem:[#allocation2 + $0x1e0] sm:$0xff]
    %v95 = vld [vmem:[#allocation2 + $0x1e8] sm:$0xff]
    %v96 = vld [vmem:[#allocation2 + $0x1f0] sm:$0xff]
    %v97 = vld [vmem:[#allocation2 + $0x1f8] sm:$0xff]
    %vm98 = vcmask 523264
    %v100 = vsel %vm98, %v32, 0
    %v103 = vsel %vm98, %v33, 0
    %105 = vmatprep.subr.mxu0 %v35
    %106 = vmatpush1.msra.mxu0 %v34
    %107 = vmatprep.subr.mxu0 %v43
    %108 = vmatpush1.msra.mxu0 %v42
    %109 = vmatprep.subr.mxu0 %v51
    %110 = vmatpush1.msra.mxu0 %v50
    %111 = vmatprep.subr.mxu0 %v59
    %112 = vmatpush1.msra.mxu0 %v58
    %113 = vmatprep.subr.mxu0 %v67
    %114 = vmatpush1.msra.mxu0 %v66
    %115 = vmatprep.subr.mxu0 %v75
    %116 = vmatpush1.msra.mxu0 %v74
    %117 = vmatprep.subr.mxu0 %v83
    %118 = vmatpush1.msra.mxu0 %v82
    %119 = vmatprep.subr.mxu0 %v91
    %120 = vmatpush1.msra.mxu0 %v90
    %121 = vmatprep.subr.mxu0 0.0
    %122 = vmatpush1.msra.mxu0 0.0
    %123 = vmatprep.subr.mxu0 0.0
    %124 = vmatpush1.msra.mxu0 0.0
    %125 = vmatprep.subr.mxu0 0.0
    %126 = vmatpush1.msra.mxu0 0.0
    %127 = vmatprep.subr.mxu0 0.0
    %128 = vmatpush1.msra.mxu0 0.0
    %129 = vmatprep.subr.mxu0 0.0
    %130 = vmatpush1.msra.mxu0 0.0
    %131 = vmatprep.subr.mxu0 0.0
    %132 = vmatpush1.msra.mxu0 0.0
    %133 = vmatprep.subr.mxu0 0.0
    %134 = vmatpush1.msra.mxu0 0.0
    %135 = vmatprep.subr.mxu0 0.0
    %136 = vmatpush1.msra.mxu0 0.0
    %137 = vmatprep.subr.mxu0 0.0
    %138 = vmatpush1.msra.mxu0 0.0
    %139 = vmatprep.subr.mxu0 0.0
    %140 = vmatpush1.msra.mxu0 0.0
    %141 = vmatprep.subr.mxu0 0.0
    %142 = vmatpush1.msra.mxu0 0.0
    %143 = vmatprep.subr.mxu0 0.0
    %144 = vmatpush1.msra.mxu0 0.0
    %145 = vmatprep.subr.mxu0 0.0
    %146 = vmatpush1.msra.mxu0 0.0
    %147 = vmatprep.subr.mxu0 0.0
    %148 = vmatpush1.msra.mxu0 0.0
    %149 = vmatprep.subr.mxu0 0.0
    %150 = vmatpush1.msra.mxu0 0.0
    %151 = vmatprep.subr.mxu0 0.0
    %152 = vmatpush1.msra.mxu0 0.0
    %153 = vmatprep.subr.mxu0 0.0
    %154 = vmatpush1.msra.mxu0 0.0
    %155 = vmatprep.subr.mxu0 0.0
    %156 = vmatpush1.msra.mxu0 0.0
    %157 = vmatprep.subr.mxu0 0.0
    %158 = vmatpush1.msra.mxu0 0.0
    %159 = vmatprep.subr.mxu0 0.0
    %160 = vmatpush1.msra.mxu0 0.0
    %161 = vmatprep.subr.mxu0 0.0
    %162 = vmatpush1.msra.mxu0 0.0
    %163 = vmatprep.subr.mxu0 0.0
    %164 = vmatpush1.msra.mxu0 0.0
    %165 = vmatprep.subr.mxu0 0.0
    %166 = vmatpush1.msra.mxu0 0.0
    %167 = vmatprep.subr.mxu0 0.0
    %168 = vmatpush1.msra.mxu0 0.0
    %169 = vmatprep.mubr.f32.mxu0 0.0
    %170 = vmatmul.mubr.f32.gmra.mrb[0].mxu0 %v100
    %v171 = vpop.f32.mrb[0].mxu0
    %v172 = vadd.f32 0.0, %v171
    %v173 = vpop.f32.mrb[0].mxu0
    %v174 = vadd.f32 0.0, %v173
    %175 = vmatprep.mubr.f32.mxu0 0.0
    %176 = vmatmul.mubr.f32.gmra.mrb[0].mxu0 %v103
    %v177 = vpop.f32.mrb[0].mxu0
    %v178 = vadd.f32 0.0, %v177
    %v179 = vpop.f32.mrb[0].mxu0
    %v180 = vadd.f32 0.0, %v179
    %181 = vdwg.mxu0
    %182 = vmatprep.subr.mxu0 %v37
    %183 = vmatpush1.msra.mxu0 %v36
    %184 = vmatprep.subr.mxu0 %v45
    %185 = vmatpush1.msra.mxu0 %v44
    %186 = vmatprep.subr.mxu0 %v53
    %187 = vmatpush1.msra.mxu0 %v52
    %188 = vmatprep.subr.mxu0 %v61
    %189 = vmatpush1.msra.mxu0 %v60
    %190 = vmatprep.subr.mxu0 %v69
    %191 = vmatpush1.msra.mxu0 %v68
    %192 = vmatprep.subr.mxu0 %v77
    %193 = vmatpush1.msra.mxu0 %v76
    %194 = vmatprep.subr.mxu0 %v85
    %195 = vmatpush1.msra.mxu0 %v84
    %196 = vmatprep.subr.mxu0 %v93
    %197 = vmatpush1.msra.mxu0 %v92
    %198 = vmatprep.subr.mxu0 0.0
    %199 = vmatpush1.msra.mxu0 0.0
    %200 = vmatprep.subr.mxu0 0.0
    %201 = vmatpush1.msra.mxu0 0.0
    %202 = vmatprep.subr.mxu0 0.0
    %203 = vmatpush1.msra.mxu0 0.0
    %204 = vmatprep.subr.mxu0 0.0
    %205 = vmatpush1.msra.mxu0 0.0
    %206 = vmatprep.subr.mxu0 0.0
    %207 = vmatpush1.msra.mxu0 0.0
    %208 = vmatprep.subr.mxu0 0.0
    %209 = vmatpush1.msra.mxu0 0.0
    %210 = vmatprep.subr.mxu0 0.0
    %211 = vmatpush1.msra.mxu0 0.0
    %212 = vmatprep.subr.mxu0 0.0
    %213 = vmatpush1.msra.mxu0 0.0
    %214 = vmatprep.subr.mxu0 0.0
    %215 = vmatpush1.msra.mxu0 0.0
    %216 = vmatprep.subr.mxu0 0.0
    %217 = vmatpush1.msra.mxu0 0.0
    %218 = vmatprep.subr.mxu0 0.0
    %219 = vmatpush1.msra.mxu0 0.0
    %220 = vmatprep.subr.mxu0 0.0
    %221 = vmatpush1.msra.mxu0 0.0
    %222 = vmatprep.subr.mxu0 0.0
    %223 = vmatpush1.msra.mxu0 0.0
    %224 = vmatprep.subr.mxu0 0.0
    %225 = vmatpush1.msra.mxu0 0.0
    %226 = vmatprep.subr.mxu0 0.0
    %227 = vmatpush1.msra.mxu0 0.0
    %228 = vmatprep.subr.mxu0 0.0
    %229 = vmatpush1.msra.mxu0 0.0
    %230 = vmatprep.subr.mxu0 0.0
    %231 = vmatpush1.msra.mxu0 0.0
    %232 = vmatprep.subr.mxu0 0.0
    %233 = vmatpush1.msra.mxu0 0.0
    %234 = vmatprep.subr.mxu0 0.0
    %235 = vmatpush1.msra.mxu0 0.0
    %236 = vmatprep.subr.mxu0 0.0
    %237 = vmatpush1.msra.mxu0 0.0
    %238 = vmatprep.subr.mxu0 0.0
    %239 = vmatpush1.msra.mxu0 0.0
    %240 = vmatprep.subr.mxu0 0.0
    %241 = vmatpush1.msra.mxu0 0.0
    %242 = vmatprep.subr.mxu0 0.0
    %243 = vmatpush1.msra.mxu0 0.0
    %244 = vmatprep.subr.mxu0 0.0
    %245 = vmatpush1.msra.mxu0 0.0
    %246 = vmatprep.mubr.f32.mxu0 0.0
    %247 = vmatmul.mubr.f32.gmra.mrb[0].mxu0 %v100
    %v248 = vpop.f32.mrb[0].mxu0
    %v249 = vadd.f32 0.0, %v248
    %v250 = vpop.f32.mrb[0].mxu0
    %v251 = vadd.f32 0.0, %v250
    %252 = vmatprep.mubr.f32.mxu0 0.0
    %253 = vmatmul.mubr.f32.gmra.mrb[0].mxu0 %v103
    %v254 = vpop.f32.mrb[0].mxu0
    %v255 = vadd.f32 0.0, %v254
    %v256 = vpop.f32.mrb[0].mxu0
    %v257 = vadd.f32 0.0, %v256
    %258 = vdwg.mxu0
    %259 = vmatprep.subr.mxu0 %v39
    %260 = vmatpush1.msra.mxu0 %v38
    %261 = vmatprep.subr.mxu0 %v47
    %262 = vmatpush1.msra.mxu0 %v46
    %263 = vmatprep.subr.mxu0 %v55
    %264 = vmatpush1.msra.mxu0 %v54
    %265 = vmatprep.subr.mxu0 %v63
    %266 = vmatpush1.msra.mxu0 %v62
    %267 = vmatprep.subr.mxu0 %v71
    %268 = vmatpush1.msra.mxu0 %v70
    %269 = vmatprep.subr.mxu0 %v79
    %270 = vmatpush1.msra.mxu0 %v78
    %271 = vmatprep.subr.mxu0 %v87
    %272 = vmatpush1.msra.mxu0 %v86
    %273 = vmatprep.subr.mxu0 %v95
    %274 = vmatpush1.msra.mxu0 %v94
    %275 = vmatprep.subr.mxu0 0.0
    %276 = vmatpush1.msra.mxu0 0.0
    %277 = vmatprep.subr.mxu0 0.0
    %278 = vmatpush1.msra.mxu0 0.0
    %279 = vmatprep.subr.mxu0 0.0
    %280 = vmatpush1.msra.mxu0 0.0
    %281 = vmatprep.subr.mxu0 0.0
    %282 = vmatpush1.msra.mxu0 0.0
    %283 = vmatprep.subr.mxu0 0.0
    %284 = vmatpush1.msra.mxu0 0.0
    %285 = vmatprep.subr.mxu0 0.0
    %286 = vmatpush1.msra.mxu0 0.0
    %287 = vmatprep.subr.mxu0 0.0
    %288 = vmatpush1.msra.mxu0 0.0
    %289 = vmatprep.subr.mxu0 0.0
    %290 = vmatpush1.msra.mxu0 0.0
    %291 = vmatprep.subr.mxu0 0.0
    %292 = vmatpush1.msra.mxu0 0.0
    %293 = vmatprep.subr.mxu0 0.0
    %294 = vmatpush1.msra.mxu0 0.0
    %295 = vmatprep.subr.mxu0 0.0
    %296 = vmatpush1.msra.mxu0 0.0
    %297 = vmatprep.subr.mxu0 0.0
    %298 = vmatpush1.msra.mxu0 0.0
    %299 = vmatprep.subr.mxu0 0.0
    %300 = vmatpush1.msra.mxu0 0.0
    %301 = vmatprep.subr.mxu0 0.0
    %302 = vmatpush1.msra.mxu0 0.0
    %303 = vmatprep.subr.mxu0 0.0
    %304 = vmatpush1.msra.mxu0 0.0
    %305 = vmatprep.subr.mxu0 0.0
    %306 = vmatpush1.msra.mxu0 0.0
    %307 = vmatprep.subr.mxu0 0.0
    %308 = vmatpush1.msra.mxu0 0.0
    %309 = vmatprep.subr.mxu0 0.0
    %310 = vmatpush1.msra.mxu0 0.0
    %311 = vmatprep.subr.mxu0 0.0
    %312 = vmatpush1.msra.mxu0 0.0
    %313 = vmatprep.subr.mxu0 0.0
    %314 = vmatpush1.msra.mxu0 0.0
    %315 = vmatprep.subr.mxu0 0.0
    %316 = vmatpush1.msra.mxu0 0.0
    %317 = vmatprep.subr.mxu0 0.0
    %318 = vmatpush1.msra.mxu0 0.0
    %319 = vmatprep.subr.mxu0 0.0
    %320 = vmatpush1.msra.mxu0 0.0
    %321 = vmatprep.subr.mxu0 0.0
    %322 = vmatpush1.msra.mxu0 0.0
    %323 = vmatprep.mubr.f32.mxu0 0.0
    %324 = vmatmul.mubr.f32.gmra.mrb[0].mxu0 %v100
    %v325 = vpop.f32.mrb[0].mxu0
    %v326 = vadd.f32 0.0, %v325
    %v327 = vpop.f32.mrb[0].mxu0
    %v328 = vadd.f32 0.0, %v327
    %329 = vmatprep.mubr.f32.mxu0 0.0
    %330 = vmatmul.mubr.f32.gmra.mrb[0].mxu0 %v103
    %v331 = vpop.f32.mrb[0].mxu0
    %v332 = vadd.f32 0.0, %v331
    %v333 = vpop.f32.mrb[0].mxu0
    %v334 = vadd.f32 0.0, %v333
    %335 = vdwg.mxu0
    %336 = vmatprep.subr.mxu0 %v41
    %337 = vmatpush1.msra.mxu0 %v40
    %338 = vmatprep.subr.mxu0 %v49
    %339 = vmatpush1.msra.mxu0 %v48
    %340 = vmatprep.subr.mxu0 %v57
    %341 = vmatpush1.msra.mxu0 %v56
    %342 = vmatprep.subr.mxu0 %v65
    %343 = vmatpush1.msra.mxu0 %v64
    %344 = vmatprep.subr.mxu0 %v73
    %345 = vmatpush1.msra.mxu0 %v72
    %346 = vmatprep.subr.mxu0 %v81
    %347 = vmatpush1.msra.mxu0 %v80
    %348 = vmatprep.subr.mxu0 %v89
    %349 = vmatpush1.msra.mxu0 %v88
    %350 = vmatprep.subr.mxu0 %v97
    %351 = vmatpush1.msra.mxu0 %v96
    %352 = vmatprep.subr.mxu0 0.0
    %353 = vmatpush1.msra.mxu0 0.0
    %354 = vmatprep.subr.mxu0 0.0
    %355 = vmatpush1.msra.mxu0 0.0
    %356 = vmatprep.subr.mxu0 0.0
    %357 = vmatpush1.msra.mxu0 0.0
    %358 = vmatprep.subr.mxu0 0.0
    %359 = vmatpush1.msra.mxu0 0.0
    %360 = vmatprep.subr.mxu0 0.0
    %361 = vmatpush1.msra.mxu0 0.0
    %362 = vmatprep.subr.mxu0 0.0
    %363 = vmatpush1.msra.mxu0 0.0
    %364 = vmatprep.subr.mxu0 0.0
    %365 = vmatpush1.msra.mxu0 0.0
    %366 = vmatprep.subr.mxu0 0.0
    %367 = vmatpush1.msra.mxu0 0.0
    %368 = vmatprep.subr.mxu0 0.0
    %369 = vmatpush1.msra.mxu0 0.0
    %370 = vmatprep.subr.mxu0 0.0
    %371 = vmatpush1.msra.mxu0 0.0
    %372 = vmatprep.subr.mxu0 0.0
    %373 = vmatpush1.msra.mxu0 0.0
    %374 = vmatprep.subr.mxu0 0.0
    %375 = vmatpush1.msra.mxu0 0.0
    %376 = vmatprep.subr.mxu0 0.0
    %377 = vmatpush1.msra.mxu0 0.0
    %378 = vmatprep.subr.mxu0 0.0
    %379 = vmatpush1.msra.mxu0 0.0
    %380 = vmatprep.subr.mxu0 0.0
    %381 = vmatpush1.msra.mxu0 0.0
    %382 = vmatprep.subr.mxu0 0.0
    %383 = vmatpush1.msra.mxu0 0.0
    %384 = vmatprep.subr.mxu0 0.0
    %385 = vmatpush1.msra.mxu0 0.0
    %386 = vmatprep.subr.mxu0 0.0
    %387 = vmatpush1.msra.mxu0 0.0
    %388 = vmatprep.subr.mxu0 0.0
    %389 = vmatpush1.msra.mxu0 0.0
    %390 = vmatprep.subr.mxu0 0.0
    %391 = vmatpush1.msra.mxu0 0.0
    %392 = vmatprep.subr.mxu0 0.0
    %393 = vmatpush1.msra.mxu0 0.0
    %394 = vmatprep.subr.mxu0 0.0
    %395 = vmatpush1.msra.mxu0 0.0
    %396 = vmatprep.subr.mxu0 0.0
    %397 = vmatpush1.msra.mxu0 0.0
    %398 = vmatprep.subr.mxu0 0.0
    %399 = vmatpush1.msra.mxu0 0.0
    %400 = vmatprep.mubr.f32.mxu0 0.0
    %401 = vmatmul.mubr.f32.gmra.mrb[0].mxu0 %v100
    %v402 = vpop.f32.mrb[0].mxu0
    %v403 = vadd.f32 0.0, %v402
    %v404 = vpop.f32.mrb[0].mxu0
    %v405 = vadd.f32 0.0, %v404
    %406 = vmatprep.mubr.f32.mxu0 0.0
    %407 = vmatmul.mubr.f32.gmra.mrb[0].mxu0 %v103
    %v408 = vpop.f32.mrb[0].mxu0
    %v409 = vadd.f32 0.0, %v408
    %v410 = vpop.f32.mrb[0].mxu0
    %v411 = vadd.f32 0.0, %v410
    %412 = vdwg.mxu0
    %v413 = vld [vmem:[%s3] sm:$0xff]
    %v415 = vlaneseq
    %v416 = vshrl.u32 %v415, 7
    %v417 = vsub.s32 0, %v416
    %v418 = vrot.slane %v413, %v417
    %v419 = vlaneseq
    %v420 = vshrl.u32 %v419, 7
    %v421 = vsub.s32 1, %v420
    %v422 = vrot.slane %v413, %v421
    %v423 = vlaneseq
    %v424 = vshrl.u32 %v423, 7
    %v425 = vsub.s32 2, %v424
    %v426 = vrot.slane %v413, %v425
    %v427 = vlaneseq
    %v428 = vshrl.u32 %v427, 7
    %v429 = vsub.s32 3, %v428
    %v430 = vrot.slane %v413, %v429
    %v431 = vlaneseq
    %v432 = vshrl.u32 %v431, 7
    %v433 = vsub.s32 4, %v432
    %v434 = vrot.slane %v413, %v433
    %v435 = vlaneseq
    %v436 = vshrl.u32 %v435, 7
    %v437 = vsub.s32 5, %v436
    %v438 = vrot.slane %v413, %v437
    %v439 = vlaneseq
    %v440 = vshrl.u32 %v439, 7
    %v441 = vsub.s32 6, %v440
    %v442 = vrot.slane %v413, %v441
    %v443 = vlaneseq
    %v444 = vshrl.u32 %v443, 7
    %v445 = vsub.s32 7, %v444
    %v446 = vrot.slane %v413, %v445
    %v455 = vmul.f32 %v172, %v418
    %v456 = vmul.f32 %v174, %v422
    %v457 = vmul.f32 %v249, %v426
    %v458 = vmul.f32 %v251, %v430
    %v459 = vmul.f32 %v326, %v434
    %v460 = vmul.f32 %v328, %v438
    %v461 = vmul.f32 %v403, %v442
    %v462 = vmul.f32 %v405, %v446
    %v463 = vmul.f32 %v178, %v418
    %v464 = vmul.f32 %v180, %v422
    %v465 = vmul.f32 %v255, %v426
    %v466 = vmul.f32 %v257, %v430
    %v467 = vmul.f32 %v332, %v434
    %v468 = vmul.f32 %v334, %v438
    %v469 = vmul.f32 %v409, %v442
    %v470 = vmul.f32 %v411, %v446
    %v471 = vmax.f32 %v455, -1.0
    %v472 = vmax.f32 %v456, -1.0
    %v473 = vmax.f32 %v457, -1.0
    %v474 = vmax.f32 %v458, -1.0
    %v475 = vmax.f32 %v459, -1.0
    %v476 = vmax.f32 %v460, -1.0
    %v477 = vmax.f32 %v461, -1.0
    %v478 = vmax.f32 %v462, -1.0
    %v479 = vmax.f32 %v463, -1.0
    %v480 = vmax.f32 %v464, -1.0
    %v481 = vmax.f32 %v465, -1.0
    %v482 = vmax.f32 %v466, -1.0
    %v483 = vmax.f32 %v467, -1.0
    %v484 = vmax.f32 %v468, -1.0
    %v485 = vmax.f32 %v469, -1.0
    %v486 = vmax.f32 %v470, -1.0
    %v487 = vmin.f32 %v471, 1.0
    %v488 = vmin.f32 %v472, 1.0
    %v489 = vmin.f32 %v473, 1.0
    %v490 = vmin.f32 %v474, 1.0
    %v491 = vmin.f32 %v475, 1.0
    %v492 = vmin.f32 %v476, 1.0
    %v493 = vmin.f32 %v477, 1.0
    %v494 = vmin.f32 %v478, 1.0
    %v495 = vmin.f32 %v479, 1.0
    %v496 = vmin.f32 %v480, 1.0
    %v497 = vmin.f32 %v481, 1.0
    %v498 = vmin.f32 %v482, 1.0
    %v499 = vmin.f32 %v483, 1.0
    %v500 = vmin.f32 %v484, 1.0
    %v501 = vmin.f32 %v485, 1.0
    %v502 = vmin.f32 %v486, 1.0
    %v503 = vmul.f32 %v487, %v487
    %v504 = vmul.f32 %v488, %v488
    %v505 = vmul.f32 %v489, %v489
    %v506 = vmul.f32 %v490, %v490
    %v507 = vmul.f32 %v491, %v491
    %v508 = vmul.f32 %v492, %v492
    %v509 = vmul.f32 %v493, %v493
    %v510 = vmul.f32 %v494, %v494
    %v511 = vmul.f32 %v495, %v495
    %v512 = vmul.f32 %v496, %v496
    %v513 = vmul.f32 %v497, %v497
    %v514 = vmul.f32 %v498, %v498
    %v515 = vmul.f32 %v499, %v499
    %v516 = vmul.f32 %v500, %v500
    %v517 = vmul.f32 %v501, %v501
    %v518 = vmul.f32 %v502, %v502
    %v519 = vsub.f32 1.0, %v503
    %v520 = vsub.f32 1.0, %v504
    %v521 = vsub.f32 1.0, %v505
    %v522 = vsub.f32 1.0, %v506
    %v523 = vsub.f32 1.0, %v507
    %v524 = vsub.f32 1.0, %v508
    %v525 = vsub.f32 1.0, %v509
    %v526 = vsub.f32 1.0, %v510
    %v527 = vsub.f32 1.0, %v511
    %v528 = vsub.f32 1.0, %v512
    %v529 = vsub.f32 1.0, %v513
    %v530 = vsub.f32 1.0, %v514
    %v531 = vsub.f32 1.0, %v515
    %v532 = vsub.f32 1.0, %v516
    %v533 = vsub.f32 1.0, %v517
    %v534 = vsub.f32 1.0, %v518
    %v535 = vmax.f32 %v519, 0.0
    %v536 = vmax.f32 %v520, 0.0
    %v537 = vmax.f32 %v521, 0.0
    %v538 = vmax.f32 %v522, 0.0
    %v539 = vmax.f32 %v523, 0.0
    %v540 = vmax.f32 %v524, 0.0
    %v541 = vmax.f32 %v525, 0.0
    %v542 = vmax.f32 %v526, 0.0
    %v543 = vmax.f32 %v527, 0.0
    %v544 = vmax.f32 %v528, 0.0
    %v545 = vmax.f32 %v529, 0.0
    %v546 = vmax.f32 %v530, 0.0
    %v547 = vmax.f32 %v531, 0.0
    %v548 = vmax.f32 %v532, 0.0
    %v549 = vmax.f32 %v533, 0.0
    %v550 = vmax.f32 %v534, 0.0
    %v551 = vrsqrt.pop %v535
    %v552 = vmul.f32 %v535, %v551
    %vm553 = vcmp.eq.f32.partialorder %v535, inf
    %v554 = vsel %vm553, %v535, %v552
    %vm555 = vcmp.eq.f32.partialorder %v535, 0.0
    %v556 = vand.u32 %v535, 2147483648
    %v557 = vsel %vm555, %v556, %v554
    %v558 = vrsqrt.pop %v536
    %v559 = vmul.f32 %v536, %v558
    %vm560 = vcmp.eq.f32.partialorder %v536, inf
    %v561 = vsel %vm560, %v536, %v559
    %vm562 = vcmp.eq.f32.partialorder %v536, 0.0
    %v563 = vand.u32 %v536, 2147483648
    %v564 = vsel %vm562, %v563, %v561
    %v565 = vrsqrt.pop %v537
    %v566 = vmul.f32 %v537, %v565
    %vm567 = vcmp.eq.f32.partialorder %v537, inf
    %v568 = vsel %vm567, %v537, %v566
    %vm569 = vcmp.eq.f32.partialorder %v537, 0.0
    %v570 = vand.u32 %v537, 2147483648
    %v571 = vsel %vm569, %v570, %v568
    %v572 = vrsqrt.pop %v538
    %v573 = vmul.f32 %v538, %v572
    %vm574 = vcmp.eq.f32.partialorder %v538, inf
    %v575 = vsel %vm574, %v538, %v573
    %vm576 = vcmp.eq.f32.partialorder %v538, 0.0
    %v577 = vand.u32 %v538, 2147483648
    %v578 = vsel %vm576, %v577, %v575
    %v579 = vrsqrt.pop %v539
    %v580 = vmul.f32 %v539, %v579
    %vm581 = vcmp.eq.f32.partialorder %v539, inf
    %v582 = vsel %vm581, %v539, %v580
    %vm583 = vcmp.eq.f32.partialorder %v539, 0.0
    %v584 = vand.u32 %v539, 2147483648
    %v585 = vsel %vm583, %v584, %v582
    %v586 = vrsqrt.pop %v540
    %v587 = vmul.f32 %v540, %v586
    %vm588 = vcmp.eq.f32.partialorder %v540, inf
    %v589 = vsel %vm588, %v540, %v587
    %vm590 = vcmp.eq.f32.partialorder %v540, 0.0
    %v591 = vand.u32 %v540, 2147483648
    %v592 = vsel %vm590, %v591, %v589
    %v593 = vrsqrt.pop %v541
    %v594 = vmul.f32 %v541, %v593
    %vm595 = vcmp.eq.f32.partialorder %v541, inf
    %v596 = vsel %vm595, %v541, %v594
    %vm597 = vcmp.eq.f32.partialorder %v541, 0.0
    %v598 = vand.u32 %v541, 2147483648
    %v599 = vsel %vm597, %v598, %v596
    %v600 = vrsqrt.pop %v542
    %v601 = vmul.f32 %v542, %v600
    %vm602 = vcmp.eq.f32.partialorder %v542, inf
    %v603 = vsel %vm602, %v542, %v601
    %vm604 = vcmp.eq.f32.partialorder %v542, 0.0
    %v605 = vand.u32 %v542, 2147483648
    %v606 = vsel %vm604, %v605, %v603
    %v607 = vrsqrt.pop %v543
    %v608 = vmul.f32 %v543, %v607
    %vm609 = vcmp.eq.f32.partialorder %v543, inf
    %v610 = vsel %vm609, %v543, %v608
    %vm611 = vcmp.eq.f32.partialorder %v543, 0.0
    %v612 = vand.u32 %v543, 2147483648
    %v613 = vsel %vm611, %v612, %v610
    %v614 = vrsqrt.pop %v544
    %v615 = vmul.f32 %v544, %v614
    %vm616 = vcmp.eq.f32.partialorder %v544, inf
    %v617 = vsel %vm616, %v544, %v615
    %vm618 = vcmp.eq.f32.partialorder %v544, 0.0
    %v619 = vand.u32 %v544, 2147483648
    %v620 = vsel %vm618, %v619, %v617
    %v621 = vrsqrt.pop %v545
    %v622 = vmul.f32 %v545, %v621
    %vm623 = vcmp.eq.f32.partialorder %v545, inf
    %v624 = vsel %vm623, %v545, %v622
    %vm625 = vcmp.eq.f32.partialorder %v545, 0.0
    %v626 = vand.u32 %v545, 2147483648
    %v627 = vsel %vm625, %v626, %v624
    %v628 = vrsqrt.pop %v546
    %v629 = vmul.f32 %v546, %v628
    %vm630 = vcmp.eq.f32.partialorder %v546, inf
    %v631 = vsel %vm630, %v546, %v629
    %vm632 = vcmp.eq.f32.partialorder %v546, 0.0
    %v633 = vand.u32 %v546, 2147483648
    %v634 = vsel %vm632, %v633, %v631
    %v635 = vrsqrt.pop %v547
    %v636 = vmul.f32 %v547, %v635
    %vm637 = vcmp.eq.f32.partialorder %v547, inf
    %v638 = vsel %vm637, %v547, %v636
    %vm639 = vcmp.eq.f32.partialorder %v547, 0.0
    %v640 = vand.u32 %v547, 2147483648
    %v641 = vsel %vm639, %v640, %v638
    %v642 = vrsqrt.pop %v548
    %v643 = vmul.f32 %v548, %v642
    %vm644 = vcmp.eq.f32.partialorder %v548, inf
    %v645 = vsel %vm644, %v548, %v643
    %vm646 = vcmp.eq.f32.partialorder %v548, 0.0
    %v647 = vand.u32 %v548, 2147483648
    %v648 = vsel %vm646, %v647, %v645
    %v649 = vrsqrt.pop %v549
    %v650 = vmul.f32 %v549, %v649
    %vm651 = vcmp.eq.f32.partialorder %v549, inf
    %v652 = vsel %vm651, %v549, %v650
    %vm653 = vcmp.eq.f32.partialorder %v549, 0.0
    %v654 = vand.u32 %v549, 2147483648
    %v655 = vsel %vm653, %v654, %v652
    %v656 = vrsqrt.pop %v550
    %v657 = vmul.f32 %v550, %v656
    %vm658 = vcmp.eq.f32.partialorder %v550, inf
    %v659 = vsel %vm658, %v550, %v657
    %vm660 = vcmp.eq.f32.partialorder %v550, 0.0
    %v661 = vand.u32 %v550, 2147483648
    %v662 = vsel %vm660, %v661, %v659
    %v663 = vmul.f32 %v487, 0.87758255
    %v664 = vmul.f32 %v488, 0.87758255
    %v665 = vmul.f32 %v489, 0.87758255
    %v666 = vmul.f32 %v490, 0.87758255
    %v667 = vmul.f32 %v491, 0.87758255
    %v668 = vmul.f32 %v492, 0.87758255
    %v669 = vmul.f32 %v493, 0.87758255
    %v670 = vmul.f32 %v494, 0.87758255
    %v671 = vmul.f32 %v495, 0.87758255
    %v672 = vmul.f32 %v496, 0.87758255
    %v673 = vmul.f32 %v497, 0.87758255
    %v674 = vmul.f32 %v498, 0.87758255
    %v675 = vmul.f32 %v499, 0.87758255
    %v676 = vmul.f32 %v500, 0.87758255
    %v677 = vmul.f32 %v501, 0.87758255
    %v678 = vmul.f32 %v502, 0.87758255
    %v679 = vmul.f32 %v557, 0.47942555
    %v680 = vmul.f32 %v564, 0.47942555
    %v681 = vmul.f32 %v571, 0.47942555
    %v682 = vmul.f32 %v578, 0.47942555
    %v683 = vmul.f32 %v585, 0.47942555
    %v684 = vmul.f32 %v592, 0.47942555
    %v685 = vmul.f32 %v599, 0.47942555
    %v686 = vmul.f32 %v606, 0.47942555
    %v687 = vmul.f32 %v613, 0.47942555
    %v688 = vmul.f32 %v620, 0.47942555
    %v689 = vmul.f32 %v627, 0.47942555
    %v690 = vmul.f32 %v634, 0.47942555
    %v691 = vmul.f32 %v641, 0.47942555
    %v692 = vmul.f32 %v648, 0.47942555
    %v693 = vmul.f32 %v655, 0.47942555
    %v694 = vmul.f32 %v662, 0.47942555
    %v695 = vsub.f32 %v663, %v679
    %v696 = vsub.f32 %v664, %v680
    %v697 = vsub.f32 %v665, %v681
    %v698 = vsub.f32 %v666, %v682
    %v699 = vsub.f32 %v667, %v683
    %v700 = vsub.f32 %v668, %v684
    %v701 = vsub.f32 %v669, %v685
    %v702 = vsub.f32 %v670, %v686
    %v703 = vsub.f32 %v671, %v687
    %v704 = vsub.f32 %v672, %v688
    %v705 = vsub.f32 %v673, %v689
    %v706 = vsub.f32 %v674, %v690
    %v707 = vsub.f32 %v675, %v691
    %v708 = vsub.f32 %v676, %v692
    %v709 = vsub.f32 %v677, %v693
    %v710 = vsub.f32 %v678, %v694
    %v711 = vsub.f32 %v487, -0.87758255
    %v712 = vsub.f32 %v488, -0.87758255
    %v713 = vsub.f32 %v489, -0.87758255
    %v714 = vsub.f32 %v490, -0.87758255
    %v715 = vsub.f32 %v491, -0.87758255
    %v716 = vsub.f32 %v492, -0.87758255
    %v717 = vsub.f32 %v493, -0.87758255
    %v718 = vsub.f32 %v494, -0.87758255
    %v719 = vsub.f32 %v495, -0.87758255
    %v720 = vsub.f32 %v496, -0.87758255
    %v721 = vsub.f32 %v497, -0.87758255
    %v722 = vsub.f32 %v498, -0.87758255
    %v723 = vsub.f32 %v499, -0.87758255
    %v724 = vsub.f32 %v500, -0.87758255
    %v725 = vsub.f32 %v501, -0.87758255
    %v726 = vsub.f32 %v502, -0.87758255
    %vm727 = vcmp.le.f32.partialorder %v711, 0.0
    %vm728 = vcmp.le.f32.partialorder %v712, 0.0
    %vm729 = vcmp.le.f32.partialorder %v713, 0.0
    %vm730 = vcmp.le.f32.partialorder %v714, 0.0
    %vm731 = vcmp.le.f32.partialorder %v715, 0.0
    %vm732 = vcmp.le.f32.partialorder %v716, 0.0
    %vm733 = vcmp.le.f32.partialorder %v717, 0.0
    %vm734 = vcmp.le.f32.partialorder %v718, 0.0
    %vm735 = vcmp.le.f32.partialorder %v719, 0.0
    %vm736 = vcmp.le.f32.partialorder %v720, 0.0
    %vm737 = vcmp.le.f32.partialorder %v721, 0.0
    %vm738 = vcmp.le.f32.partialorder %v722, 0.0
    %vm739 = vcmp.le.f32.partialorder %v723, 0.0
    %vm740 = vcmp.le.f32.partialorder %v724, 0.0
    %vm741 = vcmp.le.f32.partialorder %v725, 0.0
    %vm742 = vcmp.le.f32.partialorder %v726, 0.0
    %v743 = vsub.f32 %v487, 0.23971277
    %v744 = vsub.f32 %v488, 0.23971277
    %v745 = vsub.f32 %v489, 0.23971277
    %v746 = vsub.f32 %v490, 0.23971277
    %v747 = vsub.f32 %v491, 0.23971277
    %v748 = vsub.f32 %v492, 0.23971277
    %v749 = vsub.f32 %v493, 0.23971277
    %v750 = vsub.f32 %v494, 0.23971277
    %v751 = vsub.f32 %v495, 0.23971277
    %v752 = vsub.f32 %v496, 0.23971277
    %v753 = vsub.f32 %v497, 0.23971277
    %v754 = vsub.f32 %v498, 0.23971277
    %v755 = vsub.f32 %v499, 0.23971277
    %v756 = vsub.f32 %v500, 0.23971277
    %v757 = vsub.f32 %v501, 0.23971277
    %v758 = vsub.f32 %v502, 0.23971277
    %v759 = vsel %vm727, %v743, %v695
    %v760 = vsel %vm728, %v744, %v696
    %v761 = vsel %vm729, %v745, %v697
    %v762 = vsel %vm730, %v746, %v698
    %v763 = vsel %vm731, %v747, %v699
    %v764 = vsel %vm732, %v748, %v700
    %v765 = vsel %vm733, %v749, %v701
    %v766 = vsel %vm734, %v750, %v702
    %v767 = vsel %vm735, %v751, %v703
    %v768 = vsel %vm736, %v752, %v704
    %v769 = vsel %vm737, %v753, %v705
    %v770 = vsel %vm738, %v754, %v706
    %v771 = vsel %vm739, %v755, %v707
    %v772 = vsel %vm740, %v756, %v708
    %v773 = vsel %vm741, %v757, %v709
    %v774 = vsel %vm742, %v758, %v710
    %v775 = vld [vmem:[%s0] sm:$0xff]
    %v776 = vld [vmem:[%s0 + $0x8] sm:$0xff]
    %s777 = smul.u32 0, 1024
    %v778 = vstv %s777
    %v779 = vsub.s32 %v775, %v778
    %v780 = vsub.s32 %v776, %v778
    %v781 = vlaneseq
    %v782 = vand.u32 %v781, 127
    %v783 = vadd.s32 %v782, 128
    %v784 = vadd.s32 %v782, 256
    %v785 = vadd.s32 %v782, 384
    %v786 = vadd.s32 %v782, 512
    %v787 = vadd.s32 %v782, 640
    %v788 = vadd.s32 %v782, 768
    %v789 = vadd.s32 %v782, 896
    %790 = vset.pattern.permute.xlu0 0
    %791 = vperm.xlu0 %790, %v779
    %v792 = vpop.permute.xlu0 %791
    %793 = vset.pattern.permute.xlu0 0
    %794 = vperm.xlu0 %793, %v780
    %v795 = vpop.permute.xlu0 %794
    %vm796 = vcmp.eq.s32.totalorder %v782, %v792
    %vm797 = vcmp.eq.s32.totalorder %v783, %v792
    %vm798 = vcmp.eq.s32.totalorder %v784, %v792
    %vm799 = vcmp.eq.s32.totalorder %v785, %v792
    %vm800 = vcmp.eq.s32.totalorder %v786, %v792
    %vm801 = vcmp.eq.s32.totalorder %v787, %v792
    %vm802 = vcmp.eq.s32.totalorder %v788, %v792
    %vm803 = vcmp.eq.s32.totalorder %v789, %v792
    %vm804 = vcmp.eq.s32.totalorder %v782, %v795
    %vm805 = vcmp.eq.s32.totalorder %v783, %v795
    %vm806 = vcmp.eq.s32.totalorder %v784, %v795
    %vm807 = vcmp.eq.s32.totalorder %v785, %v795
    %vm808 = vcmp.eq.s32.totalorder %v786, %v795
    %vm809 = vcmp.eq.s32.totalorder %v787, %v795
    %vm810 = vcmp.eq.s32.totalorder %v788, %v795
    %vm811 = vcmp.eq.s32.totalorder %v789, %v795
    %v812 = vsel %vm796, %v759, %v487
    %v813 = vsel %vm797, %v760, %v488
    %v814 = vsel %vm798, %v761, %v489
    %v815 = vsel %vm799, %v762, %v490
    %v816 = vsel %vm800, %v763, %v491
    %v817 = vsel %vm801, %v764, %v492
    %v818 = vsel %vm802, %v765, %v493
    %v819 = vsel %vm803, %v766, %v494
    %v820 = vsel %vm804, %v767, %v495
    %v821 = vsel %vm805, %v768, %v496
    %v822 = vsel %vm806, %v769, %v497
    %v823 = vsel %vm807, %v770, %v498
    %v824 = vsel %vm808, %v771, %v499
    %v825 = vsel %vm809, %v772, %v500
    %v826 = vsel %vm810, %v773, %v501
    %v827 = vsel %vm811, %v774, %v502
    %v828 = vmul.f32 %v812, 64.0
    %v829 = vmul.f32 %v813, 64.0
    %v830 = vmul.f32 %v814, 64.0
    %v831 = vmul.f32 %v815, 64.0
    %v832 = vmul.f32 %v816, 64.0
    %v833 = vmul.f32 %v817, 64.0
    %v834 = vmul.f32 %v818, 64.0
    %v835 = vmul.f32 %v819, 64.0
    %v836 = vmul.f32 %v820, 64.0
    %v837 = vmul.f32 %v821, 64.0
    %v838 = vmul.f32 %v822, 64.0
    %v839 = vmul.f32 %v823, 64.0
    %v840 = vmul.f32 %v824, 64.0
    %v841 = vmul.f32 %v825, 64.0
    %v842 = vmul.f32 %v826, 64.0
    %v843 = vmul.f32 %v827, 64.0
    %844 = vst [vmem:[#allocation5] sm:$0xff] %v828
    %845 = vst [vmem:[#allocation5 + $0x8] sm:$0xff] %v829
    %846 = vst [vmem:[#allocation5 + $0x10] sm:$0xff] %v830
    %847 = vst [vmem:[#allocation5 + $0x18] sm:$0xff] %v831
    %848 = vst [vmem:[#allocation5 + $0x20] sm:$0xff] %v832
    %849 = vst [vmem:[#allocation5 + $0x28] sm:$0xff] %v833
    %850 = vst [vmem:[#allocation5 + $0x30] sm:$0xff] %v834
    %851 = vst [vmem:[#allocation5 + $0x38] sm:$0xff] %v835
    %852 = vst [vmem:[#allocation5 + $0x40] sm:$0xff] %v836
    %853 = vst [vmem:[#allocation5 + $0x48] sm:$0xff] %v837
    %854 = vst [vmem:[#allocation5 + $0x50] sm:$0xff] %v838
    %855 = vst [vmem:[#allocation5 + $0x58] sm:$0xff] %v839
    %856 = vst [vmem:[#allocation5 + $0x60] sm:$0xff] %v840
    %857 = vst [vmem:[#allocation5 + $0x68] sm:$0xff] %v841
    %858 = vst [vmem:[#allocation5 + $0x70] sm:$0xff] %v842
    %859 = vst [vmem:[#allocation5 + $0x78] sm:$0xff] %v843
    // Predicated region
    $region22: #{tpu_custom_call.1} parent=1 // pred_check
      _
    $region23: #{tpu_custom_call.1} parent=1 // pred_check_branch
      %861 = sbr.rel (0) target = $region25
    $region24: #{tpu_custom_call.1} parent=1 // pred_region
      %s863 = ssub.s32 2048, 2048
      %864 = vsyncadd [#allocation4], %s863
      %s865 = sshll.u32 [#allocation5], 4
      %s866 = int_to_ptr.vmem [resolvable:$true] %s865
      %871 = dma.vmem_to_hbm [thread:$0]  %s866, 2048, %s4, [#allocation4], 1024, 1024, 64
    $region25: #{tpu_custom_call.1} parent=1 // pred_fallthru
      _
    // Predicated region
    $region26: #{tpu_custom_call.1} parent=1 // pred_check
      _
    $region27: #{tpu_custom_call.1} parent=1 // pred_check_branch
      %873 = sbr.rel (0) target = $region29
    $region28: #{tpu_custom_call.1} parent=1 // pred_region
      %874 = dma.done [#allocation4], 2048
    $region29: #{tpu_custom_call.1} parent=1 // pred_fallthru
      _
    %875 = vsyncpa [#allocation3], 1
    %876 = vsyncpa [#allocation4], 1

</llo_original>
